<compile_context>
chip_gen: v7x
topology: tpu7x:2x2x1
jax: 0.10.0
libtpu: 0.0.40
codegen_flags: <defaults>
</compile_context>

<pallas_src>
import functools

import jax
import jax.numpy as jnp
from jax.experimental import pallas as pl
from jax.experimental.pallas import tpu as pltpu

_LANES = 128
_MAX_ROW_TILE = 1024          # (1024, 128) f32 = 512 KiB per input block
_SMOOTH = 1e-5


def _round_up(x, m):
    return ((x + m - 1) // m) * m


def _dice_partial_kernel(x_ref, t_ref, o_ref,
                         inter_acc, insq_acc, tsq_acc, *,
                         rows_total, row_tile, steps_per_part):
    p = pl.program_id(0)
    i = pl.program_id(1)

    @pl.when(i == 0)
    def _():
        inter_acc[...] = jnp.zeros_like(inter_acc)
        insq_acc[...] = jnp.zeros_like(insq_acc)
        tsq_acc[...] = jnp.zeros_like(tsq_acc)

    # Logical (unclamped) block id -> global row offsets, used only for masking
    # padded rows / fully-out-of-range blocks to zero contribution.
    blk = p * steps_per_part + i
    row0 = blk * row_tile
    row_ids = row0 + jax.lax.broadcasted_iota(jnp.int32, (row_tile, 1), 0)
    valid = row_ids < rows_total                          # (row_tile, 1) bool

    x = jax.nn.sigmoid(x_ref[...].astype(jnp.float32))    # EUP
    x = jnp.where(valid, x, 0.0)                          # zero invalid rows
    t_pos = jnp.logical_and(t_ref[...].astype(jnp.float32) > 0.5, valid)

    # Vector-shaped accumulators: pure VPU work per step, no per-step XLU reduce.
    inter_acc[...] += jnp.where(t_pos, x, 0.0)            # sigmoid(x) * bin(t)
    insq_acc[...] += x * x                                # sigmoid(x)^2
    tsq_acc[...] += jnp.where(t_pos, 1.0, 0.0)            # bin(t)^2 == bin(t)

    @pl.when(i == pl.num_programs(1) - 1)
    def _():
        def fold(v):                                      # (row_tile,128)->(8,128)
            return v.reshape(row_tile // 8, 8, _LANES).sum(axis=0)
        o_ref[0, 0] = fold(inter_acc[...])
        o_ref[0, 1] = fold(insq_acc[...])
        o_ref[0, 2] = fold(tsq_acc[...])


def dice_loss2(inputs, target, weight=1.0):
    """Pallas implementation of DiceLoss2().forward(inputs, target, weight)."""
    n = inputs.size
    flat_x = jnp.ravel(inputs)
    flat_t = jnp.ravel(target)

    rows = n // _LANES
    n_main = rows * _LANES
    n_tail = n - n_main

    inter = jnp.float32(0.0)
    insq = jnp.float32(0.0)
    tsq = jnp.float32(0.0)

    if rows > 0:
        # Lane-dense slab; contiguous reshape is free (no extra HBM pad pass).
        x2d = flat_x[:n_main].reshape(rows, _LANES)
        t2d = flat_t[:n_main].reshape(rows, _LANES)

        row_tile = min(_MAX_ROW_TILE, _round_up(rows, 8))
        n_blocks = pl.cdiv(rows, row_tile)
        num_parts = 2 if n_blocks >= 2 else 1      # both TCs on v7x
        steps_per_part = pl.cdiv(n_blocks, num_parts)

        def in_map(p, i):
            blk = p * steps_per_part + i
            # Clamp fully-out-of-range logical blocks (their contribution is
            # masked to zero inside the kernel).
            return (jnp.minimum(blk, n_blocks - 1), 0)

        kernel = functools.partial(
            _dice_partial_kernel,
            rows_total=rows, row_tile=row_tile, steps_per_part=steps_per_part)

        partials = pl.pallas_call(
            kernel,
            out_shape=jax.ShapeDtypeStruct((num_parts, 3, 8, _LANES), jnp.float32),
            grid_spec=pltpu.PrefetchScalarGridSpec(
                num_scalar_prefetch=0,
                grid=(num_parts, steps_per_part),
                in_specs=[
                    pl.BlockSpec((row_tile, _LANES), in_map),
                    pl.BlockSpec((row_tile, _LANES), in_map),
                ],
                out_specs=pl.BlockSpec((1, 3, 8, _LANES),
                                       lambda p, i: (p, 0, 0, 0)),
                scratch_shapes=[
                    pltpu.VMEM((row_tile, _LANES), jnp.float32),  # intersection
                    pltpu.VMEM((row_tile, _LANES), jnp.float32),  # sigmoid(x)^2
                    pltpu.VMEM((row_tile, _LANES), jnp.float32),  # bin(t)
                ],
            ),
            compiler_params=pltpu.CompilerParams(
                dimension_semantics=("parallel", "arbitrary"),
            ),
        )(x2d, t2d)

        sums = jnp.sum(partials, axis=(0, 2, 3))   # tiny final reduce in XLA
        inter, insq, tsq = sums[0], sums[1], sums[2]

    if n_tail > 0:
        # Ragged tail (< 128 elements): plain JAX, added to the kernel partials.
        xt = jax.nn.sigmoid(flat_x[n_main:].astype(jnp.float32))
        tt = flat_t[n_main:].astype(jnp.float32) > 0.5
        inter = inter + jnp.sum(jnp.where(tt, xt, 0.0))
        insq = insq + jnp.sum(xt * xt)
        tsq = tsq + jnp.sum(tt.astype(jnp.float32))

    num = 2.0 * weight * inter + _SMOOTH
    den = insq + tsq + _SMOOTH
    return 1.0 - num / den


def _dice_loss2_ref(inputs, target, weight=1.0):
    """Pure-JAX reference mirroring the PyTorch module."""
    x = jax.nn.sigmoid(inputs.astype(jnp.float32)).reshape(-1)
    t = (target.astype(jnp.float32) > 0.5).astype(jnp.float32).reshape(-1)
    inter = jnp.sum(x * t)
    dice = (2.0 * weight * inter + _SMOOTH) / (
        jnp.sum(x * x) + jnp.sum(t * t) + _SMOOTH)
    return 1.0 - dice


if __name__ == "__main__":
    key = jax.random.PRNGKey(0)

    # Primary small NCHW example (typical segmentation-style shapes).
    k1, k2 = jax.random.split(key)
    x = jax.random.normal(k1, (2, 4, 16, 16), dtype=jnp.float32)
    tgt = jax.random.uniform(k2, (2, 4, 16, 16), dtype=jnp.float32)

    loss = jax.block_until_ready(dice_loss2(x, tgt, weight=1.0))
    ref = _dice_loss2_ref(x, tgt, weight=1.0)
    assert jnp.allclose(loss, ref, atol=1e-5, rtol=1e-5), (loss, ref)

    # Extra shapes exercising the multi-block grid, the two-part parallel split,
    # partial-last-block masking, and the ragged (<128 elem) tail path.
    for shape, w in (((2, 4, 210, 160), 1.0), ((3, 5, 17, 19), 0.7)):
        ka, kb, key = jax.random.split(key, 3)
        xi = jax.random.normal(ka, shape, dtype=jnp.float32)
        ti = jax.random.uniform(kb, shape, dtype=jnp.float32)
        got = jax.block_until_ready(dice_loss2(xi, ti, weight=w))
        want = _dice_loss2_ref(xi, ti, weight=w)
        assert jnp.allclose(got, want, atol=1e-4, rtol=1e-4), (shape, got, want)

    print("KERNEL_OK")
</pallas_src>

<mosaic_0001>
module attributes {stable_mosaic.version = 11 : i64} {
  func.func @_dice_partial_kernel(%arg0: i32, %arg1: i32, %arg2: memref<16x128xf32, #tpu.memory_space<vmem>>, %arg3: memref<16x128xf32, #tpu.memory_space<vmem>>, %arg4: memref<1x3x8x128xf32, #tpu.memory_space<vmem>>, %arg5: memref<16x128xf32, #tpu.memory_space<vmem>>, %arg6: memref<16x128xf32, #tpu.memory_space<vmem>>, %arg7: memref<16x128xf32, #tpu.memory_space<vmem>>) attributes {dimension_semantics = [#tpu.dimension_semantics<parallel>, #tpu.dimension_semantics<arbitrary>], iteration_bounds = array<i64: 1, 1>, scalar_prefetch = 0 : i64, scratch_operands = 3 : i64, tpu.core_type = #tpu.core_type<tc>, window_params = [{transform_indices = @transform_0, window_bounds = array<i64: 16, 128>}, {transform_indices = @transform_1, window_bounds = array<i64: 16, 128>}, {transform_indices = @transform_2, window_bounds = array<i64: 1, 3, 8, 128>}]} {
    %c0_i32 = arith.constant 0 : i32
    %0 = arith.cmpi eq, %arg1, %c0_i32 : i32
    %1 = arith.extui %0 : i1 to i32
    %c0_i32_0 = arith.constant 0 : i32
    %2 = arith.cmpi ne, %1, %c0_i32_0 : i32
    scf.if %2 {
      %cst_24 = arith.constant 0.000000e+00 : f32
      %44 = vector.broadcast %cst_24 : f32 to vector<16x128xf32>
      %c0_25 = arith.constant 0 : index
      %c0_26 = arith.constant 0 : index
      %45 = vector.load %arg5[%c0_25, %c0_26] : memref<16x128xf32, #tpu.memory_space<vmem>>, vector<16x128xf32>
      tpu.vector_store %arg5[%c0_25, %c0_26], %44 {strides = array<i32>} : memref<16x128xf32, #tpu.memory_space<vmem>>, vector<16x128xf32>,
      %cst_27 = arith.constant 0.000000e+00 : f32
      %46 = vector.broadcast %cst_27 : f32 to vector<16x128xf32>
      %c0_28 = arith.constant 0 : index
      %c0_29 = arith.constant 0 : index
      %47 = vector.load %arg6[%c0_28, %c0_29] : memref<16x128xf32, #tpu.memory_space<vmem>>, vector<16x128xf32>
      tpu.vector_store %arg6[%c0_28, %c0_29], %46 {strides = array<i32>} : memref<16x128xf32, #tpu.memory_space<vmem>>, vector<16x128xf32>,
      %cst_30 = arith.constant 0.000000e+00 : f32
      %48 = vector.broadcast %cst_30 : f32 to vector<16x128xf32>
      %c0_31 = arith.constant 0 : index
      %c0_32 = arith.constant 0 : index
      %49 = vector.load %arg7[%c0_31, %c0_32] : memref<16x128xf32, #tpu.memory_space<vmem>>, vector<16x128xf32>
      tpu.vector_store %arg7[%c0_31, %c0_32], %48 {strides = array<i32>} : memref<16x128xf32, #tpu.memory_space<vmem>>, vector<16x128xf32>,
    } else {
    }
    %c1_i32 = arith.constant 1 : i32
    %3 = arith.muli %arg0, %c1_i32 : i32
    %4 = arith.addi %3, %arg1 : i32
    %c16_i32 = arith.constant 16 : i32
    %5 = arith.muli %4, %c16_i32 : i32
    %6 = tpu.iota {dimensions = array<i32: 0>} : vector<16x1xi32>
    %7 = vector.broadcast %5 : i32 to vector<16x1xi32>
    %8 = arith.addi %7, %6 : vector<16x1xi32>
    %c16_i32_1 = arith.constant 16 : i32
    %9 = vector.broadcast %c16_i32_1 : i32 to vector<16x1xi32>
    %10 = arith.cmpi slt, %8, %9 : vector<16x1xi32>
    %c0 = arith.constant 0 : index
    %c0_2 = arith.constant 0 : index
    %11 = vector.load %arg2[%c0, %c0_2] : memref<16x128xf32, #tpu.memory_space<vmem>>, vector<16x128xf32>
    %12 = arith.negf %11 : vector<16x128xf32>
    %13 = math.exp %12 : vector<16x128xf32>
    %cst = arith.constant 1.000000e+00 : f32
    %14 = vector.broadcast %cst : f32 to vector<16x128xf32>
    %15 = arith.addf %14, %13 : vector<16x128xf32>
    %16 = arith.divf %14, %15 : vector<16x128xf32>
    %cst_3 = arith.constant 0.000000e+00 : f32
    %17 = vector.shape_cast %10 : vector<16x1xi1> to vector<16x1xi1>
    %18 = vector.broadcast %17 : vector<16x1xi1> to vector<16x128xi1>
    %19 = vector.broadcast %cst_3 : f32 to vector<16x128xf32>
    %20 = arith.select %18, %16, %19 : vector<16x128xi1>, vector<16x128xf32>
    %c0_4 = arith.constant 0 : index
    %c0_5 = arith.constant 0 : index
    %21 = vector.load %arg3[%c0_4, %c0_5] : memref<16x128xf32, #tpu.memory_space<vmem>>, vector<16x128xf32>
    %cst_6 = arith.constant 5.000000e-01 : f32
    %22 = vector.broadcast %cst_6 : f32 to vector<16x128xf32>
    %23 = arith.cmpf ogt, %21, %22 : vector<16x128xf32>
    %24 = vector.broadcast %10 : vector<16x1xi1> to vector<16x128xi1>
    %25 = arith.andi %23, %24 : vector<16x128xi1>
    %c0_7 = arith.constant 0 : index
    %c0_8 = arith.constant 0 : index
    %26 = vector.load %arg5[%c0_7, %c0_8] : memref<16x128xf32, #tpu.memory_space<vmem>>, vector<16x128xf32>
    %cst_9 = arith.constant 0.000000e+00 : f32
    %27 = vector.broadcast %cst_9 : f32 to vector<16x128xf32>
    %28 = arith.select %25, %20, %27 : vector<16x128xi1>, vector<16x128xf32>
    %29 = arith.addf %26, %28 : vector<16x128xf32>
    %c0_10 = arith.constant 0 : index
    %c0_11 = arith.constant 0 : index
    %30 = vector.load %arg5[%c0_10, %c0_11] : memref<16x128xf32, #tpu.memory_space<vmem>>, vector<16x128xf32>
    tpu.vector_store %arg5[%c0_10, %c0_11], %29 {strides = array<i32>} : memref<16x128xf32, #tpu.memory_space<vmem>>, vector<16x128xf32>,
    %c0_12 = arith.constant 0 : index
    %c0_13 = arith.constant 0 : index
    %31 = vector.load %arg6[%c0_12, %c0_13] : memref<16x128xf32, #tpu.memory_space<vmem>>, vector<16x128xf32>
    %32 = arith.mulf %20, %20 : vector<16x128xf32>
    %33 = arith.addf %31, %32 : vector<16x128xf32>
    %c0_14 = arith.constant 0 : index
    %c0_15 = arith.constant 0 : index
    %34 = vector.load %arg6[%c0_14, %c0_15] : memref<16x128xf32, #tpu.memory_space<vmem>>, vector<16x128xf32>
    tpu.vector_store %arg6[%c0_14, %c0_15], %33 {strides = array<i32>} : memref<16x128xf32, #tpu.memory_space<vmem>>, vector<16x128xf32>,
    %c0_16 = arith.constant 0 : index
    %c0_17 = arith.constant 0 : index
    %35 = vector.load %arg7[%c0_16, %c0_17] : memref<16x128xf32, #tpu.memory_space<vmem>>, vector<16x128xf32>
    %cst_18 = arith.constant 1.000000e+00 : f32
    %cst_19 = arith.constant 0.000000e+00 : f32
    %36 = vector.broadcast %cst_18 : f32 to vector<16x128xf32>
    %37 = vector.broadcast %cst_19 : f32 to vector<16x128xf32>
    %38 = arith.select %25, %36, %37 : vector<16x128xi1>, vector<16x128xf32>
    %39 = arith.addf %35, %38 : vector<16x128xf32>
    %c0_20 = arith.constant 0 : index
    %c0_21 = arith.constant 0 : index
    %40 = vector.load %arg7[%c0_20, %c0_21] : memref<16x128xf32, #tpu.memory_space<vmem>>, vector<16x128xf32>
    tpu.vector_store %arg7[%c0_20, %c0_21], %39 {strides = array<i32>} : memref<16x128xf32, #tpu.memory_space<vmem>>, vector<16x128xf32>,
    %c0_i32_22 = arith.constant 0 : i32
    %41 = arith.cmpi eq, %arg1, %c0_i32_22 : i32
    %42 = arith.extui %41 : i1 to i32
    %c0_i32_23 = arith.constant 0 : i32
    %43 = arith.cmpi ne, %42, %c0_i32_23 : i32
    scf.if %43 {
      %c0_24 = arith.constant 0 : index
      %c0_25 = arith.constant 0 : index
      %44 = vector.load %arg5[%c0_24, %c0_25] : memref<16x128xf32, #tpu.memory_space<vmem>>, vector<16x128xf32>
      %45 = vector.shape_cast %44 : vector<16x128xf32> to vector<2x8x128xf32>
      %cst_26 = arith.constant dense<0.000000e+00> : vector<8x128xf32>
      %46 = vector.multi_reduction <add>, %45, %cst_26 [0] : vector<2x8x128xf32> to vector<8x128xf32>
      %c0_27 = arith.constant 0 : index
      %c0_28 = arith.constant 0 : index
      %c0_29 = arith.constant 0 : index
      %c0_30 = arith.constant 0 : index
      %47 = vector.load %arg4[%c0_27, %c0_28, %c0_29, %c0_30] : memref<1x3x8x128xf32, #tpu.memory_space<vmem>>, vector<1x1x8x128xf32>
      %48 = vector.shape_cast %47 : vector<1x1x8x128xf32> to vector<8x128xf32>
      %49 = vector.shape_cast %46 : vector<8x128xf32> to vector<1x1x8x128xf32>
      tpu.vector_store %arg4[%c0_27, %c0_28, %c0_29, %c0_30], %49 {strides = array<i32>} : memref<1x3x8x128xf32, #tpu.memory_space<vmem>>, vector<1x1x8x128xf32>,
      %c0_31 = arith.constant 0 : index
      %c0_32 = arith.constant 0 : index
      %50 = vector.load %arg6[%c0_31, %c0_32] : memref<16x128xf32, #tpu.memory_space<vmem>>, vector<16x128xf32>
      %51 = vector.shape_cast %50 : vector<16x128xf32> to vector<2x8x128xf32>
      %cst_33 = arith.constant dense<0.000000e+00> : vector<8x128xf32>
      %52 = vector.multi_reduction <add>, %51, %cst_33 [0] : vector<2x8x128xf32> to vector<8x128xf32>
      %c0_34 = arith.constant 0 : index
      %c1 = arith.constant 1 : index
      %c0_35 = arith.constant 0 : index
      %c0_36 = arith.constant 0 : index
      %53 = vector.load %arg4[%c0_34, %c1, %c0_35, %c0_36] : memref<1x3x8x128xf32, #tpu.memory_space<vmem>>, vector<1x1x8x128xf32>
      %54 = vector.shape_cast %53 : vector<1x1x8x128xf32> to vector<8x128xf32>
      %55 = vector.shape_cast %52 : vector<8x128xf32> to vector<1x1x8x128xf32>
      tpu.vector_store %arg4[%c0_34, %c1, %c0_35, %c0_36], %55 {strides = array<i32>} : memref<1x3x8x128xf32, #tpu.memory_space<vmem>>, vector<1x1x8x128xf32>,
      %c0_37 = arith.constant 0 : index
      %c0_38 = arith.constant 0 : index
      %56 = vector.load %arg7[%c0_37, %c0_38] : memref<16x128xf32, #tpu.memory_space<vmem>>, vector<16x128xf32>
      %57 = vector.shape_cast %56 : vector<16x128xf32> to vector<2x8x128xf32>
      %cst_39 = arith.constant dense<0.000000e+00> : vector<8x128xf32>
      %58 = vector.multi_reduction <add>, %57, %cst_39 [0] : vector<2x8x128xf32> to vector<8x128xf32>
      %c0_40 = arith.constant 0 : index
      %c2 = arith.constant 2 : index
      %c0_41 = arith.constant 0 : index
      %c0_42 = arith.constant 0 : index
      %59 = vector.load %arg4[%c0_40, %c2, %c0_41, %c0_42] : memref<1x3x8x128xf32, #tpu.memory_space<vmem>>, vector<1x1x8x128xf32>
      %60 = vector.shape_cast %59 : vector<1x1x8x128xf32> to vector<8x128xf32>
      %61 = vector.shape_cast %58 : vector<8x128xf32> to vector<1x1x8x128xf32>
      tpu.vector_store %arg4[%c0_40, %c2, %c0_41, %c0_42], %61 {strides = array<i32>} : memref<1x3x8x128xf32, #tpu.memory_space<vmem>>, vector<1x1x8x128xf32>,
    } else {
    }
    return
  }
  func.func @transform_0(%arg0: i32, %arg1: i32) -> (i32, i32) {
    %c1_i32 = arith.constant 1 : i32
    %0 = arith.muli %arg0, %c1_i32 : i32
    %1 = arith.addi %0, %arg1 : i32
    %c0_i32 = arith.constant 0 : i32
    %2 = arith.minsi %1, %c0_i32 : i32
    %c0_i32_0 = arith.constant 0 : i32
    %c0_i32_1 = arith.constant 0 : i32
    return %2, %c0_i32_0 : i32, i32
  }
  func.func @transform_1(%arg0: i32, %arg1: i32) -> (i32, i32) {
    %c1_i32 = arith.constant 1 : i32
    %0 = arith.muli %arg0, %c1_i32 : i32
    %1 = arith.addi %0, %arg1 : i32
    %c0_i32 = arith.constant 0 : i32
    %2 = arith.minsi %1, %c0_i32 : i32
    %c0_i32_0 = arith.constant 0 : i32
    %c0_i32_1 = arith.constant 0 : i32
    return %2, %c0_i32_0 : i32, i32
  }
  func.func @transform_2(%arg0: i32, %arg1: i32) -> (i32, i32, i32, i32) {
    %c0_i32 = arith.constant 0 : i32
    %c0_i32_0 = arith.constant 0 : i32
    %c0_i32_1 = arith.constant 0 : i32
    %c0_i32_2 = arith.constant 0 : i32
    return %arg0, %c0_i32, %c0_i32_0, %c0_i32_1 : i32, i32, i32, i32
  }
}

</mosaic_0001>

<llo_original>
// kernel: tpu_custom_call.1
$region0: #{tpu_custom_call.1}
  #allocation0 [shape = 'u32[]', space=smem, size = 0x4, offset = 0x4, fixed_abs, tag = 'smem constant byte address 0x4 - core index']
  #allocation1 [shape = 'u32[144,128]{1,0:T(1,128)}', space=vmem, size = 0x12000, scoped, tag = 'internal scratch']
  #allocation2 [shape = 'f32[16,128]{1,0:T(8,128)}', space=vmem, size = 0x2000, scoped, tag = 'scratch operand']
  #allocation3 [shape = 'f32[16,128]{1,0:T(8,128)}', space=vmem, size = 0x2000, scoped, tag = 'scratch operand']
  #allocation4 [shape = 'f32[16,128]{1,0:T(8,128)}', space=vmem, size = 0x2000, scoped, tag = 'scratch operand']
  %s0 = inlined_call_operand.hbm [shape: f32[16,128], index: 0, kind: input, shape index: {}]
  %s1 = inlined_call_operand.hbm [shape: f32[16,128], index: 1, kind: input, shape index: {}]
  %s2 = inlined_call_operand.hbm [shape: f32[1,3,8,128], index: 2, kind: output, shape index: {}]
  %s3 = sld [smem:[#allocation0]]
  $region34: #{tpu_custom_call.1} parent=0
    _
  %s5 = ssub.s32 1, %s3
  %s6 = scalar_select 0, %s5, %s3
  $region1: #{tpu_custom_call.1} parent=0
    #allocation5 [shape = 'u8[8192]{0}', space=vmem, size = 0x2000, scoped, tag = 'input window, operand 0, single buffered']
    #allocation6 [shape = 's32[1]{0}', space=sflag, size = 0x4, scoped, tag = 'scoped memory for tpu_custom_call.1']
    #allocation7 [shape = 's32[1]{0}', space=sflag, size = 0x4, scoped, tag = 'scoped memory for tpu_custom_call.1']
    #allocation8 [shape = 'u8[8192]{0}', space=vmem, size = 0x2000, scoped, tag = 'input window, operand 1, single buffered']
    #allocation9 [shape = 's32[1]{0}', space=sflag, size = 0x4, scoped, tag = 'scoped memory for tpu_custom_call.1']
    #allocation10 [shape = 'u8[12288]{0}', space=vmem, size = 0x3000, scoped, tag = 'output window, operand 0, single buffered']
    %7 = vsyncpa [#allocation6], 0
    %8 = vsyncpa [#allocation9], 0
    %9 = vsyncpa [#allocation7], 0
    // Predicated region
    $region2: #{tpu_custom_call.1} parent=1 // pred_check
      _
    $region3: #{tpu_custom_call.1} parent=1 // pred_check_branch
      %11 = sbr.rel (0) target = $region5
    $region4: #{tpu_custom_call.1} parent=1 // pred_region
      %s12 = sadd.s32 0, 0
      %p13 = scmp.lt.s32.totalorder %s12, 0
      %s14 = scalar_select %p13, %s12, 0
      %s15 = smul.u32 2, %s14
      %s17 = ssub.s32 256, 256
      %18 = vsyncadd [#allocation6], %s17
      %s19 = smul.addr %s15, 128
      %s20 = scalar_lea.hbm %s0, %s19
      %s21 = sshll.u32 [#allocation5], 4
      %s22 = int_to_ptr.vmem [resolvable:$true] %s21
      %27 = dma.hbm_to_vmem [thread:$0]  %s20, 256, %s22, [#allocation6], 128, 128, 8
    $region5: #{tpu_custom_call.1} parent=1 // pred_fallthru
      _
    // Predicated region
    $region6: #{tpu_custom_call.1} parent=1 // pred_check
      _
    $region7: #{tpu_custom_call.1} parent=1 // pred_check_branch
      %29 = sbr.rel (0) target = $region9
    $region8: #{tpu_custom_call.1} parent=1 // pred_region
      %s30 = sadd.s32 0, 0
      %p31 = scmp.lt.s32.totalorder %s30, 0
      %s32 = scalar_select %p31, %s30, 0
      %s33 = smul.u32 2, %s32
      %s35 = ssub.s32 256, 256
      %36 = vsyncadd [#allocation9], %s35
      %s37 = smul.addr %s33, 128
      %s38 = scalar_lea.hbm %s1, %s37
      %s39 = sshll.u32 [#allocation8], 4
      %s40 = int_to_ptr.vmem [resolvable:$true] %s39
      %45 = dma.hbm_to_vmem [thread:$0]  %s38, 256, %s40, [#allocation9], 128, 128, 8
    $region9: #{tpu_custom_call.1} parent=1 // pred_fallthru
      _
    // Predicated region
    $region10: #{tpu_custom_call.1} parent=1 // pred_check
      _
    $region11: #{tpu_custom_call.1} parent=1 // pred_check_branch
      %47 = sbr.rel (0) target = $region13
    $region12: #{tpu_custom_call.1} parent=1 // pred_region
      %48 = dma.done [#allocation6], 256
    $region13: #{tpu_custom_call.1} parent=1 // pred_fallthru
      _
    // Predicated region
    $region14: #{tpu_custom_call.1} parent=1 // pred_check
      _
    $region15: #{tpu_custom_call.1} parent=1 // pred_check_branch
      %50 = sbr.rel (0) target = $region17
    $region16: #{tpu_custom_call.1} parent=1 // pred_region
      %51 = dma.done [#allocation9], 256
    $region17: #{tpu_custom_call.1} parent=1 // pred_fallthru
      _
    %s52 = sadd.s32 0, 0
    %p53 = scmp.lt.s32.totalorder %s52, 0
    %s54 = scalar_select %p53, %s52, 0
    %s55 = smul.u32 2, %s54
    %s56 = sadd.s32 0, 0
    %p57 = scmp.lt.s32.totalorder %s56, 0
    %s58 = scalar_select %p57, %s56, 0
    %s59 = smul.u32 2, %s58
    %p60 = scmp.eq.s32.totalorder 0, 0
    // Predicated region
    $region18: #{tpu_custom_call.1} parent=1 // pred_check
      %p61 = pneg %p60
    $region19: #{tpu_custom_call.1} parent=1 // pred_check_branch
      %63 = sbr.rel (%p61) target = $region21
    $region20: #{tpu_custom_call.1} parent=1 // pred_region
      %64 = vst [vmem:[#allocation2] sm:$0xff] 0.0
      %65 = vst [vmem:[#allocation2 + $0x8] sm:$0xff] 0.0
      %66 = vst [vmem:[#allocation3] sm:$0xff] 0.0
      %67 = vst [vmem:[#allocation3 + $0x8] sm:$0xff] 0.0
      %68 = vst [vmem:[#allocation4] sm:$0xff] 0.0
      %69 = vst [vmem:[#allocation4 + $0x8] sm:$0xff] 0.0
    $region21: #{tpu_custom_call.1} parent=1 // pred_fallthru
      _
    %s70 = sadd.s32 0, 0
    %s71 = smul.u32 %s70, 16
    %v72 = vlaneseq
    %v73 = vshrl.u32 %v72, 7
    %v74 = vadd.s32 %v73, 8
    %v75 = vstv %s71
    %v76 = vadd.s32 %v75, %v73
    %v77 = vadd.s32 %v75, %v74
    %vm78 = vcmp.lt.s32.totalorder %v76, 16
    %vm79 = vcmp.lt.s32.totalorder %v77, 16
    %v80 = vld [vmem:[#allocation5] sm:$0xff]
    %v81 = vld [vmem:[#allocation5 + $0x8] sm:$0xff]
    %v82 = vxor.u32 %v80, 2147483648
    %v83 = vxor.u32 %v81, 2147483648
    %v84 = vmul.f32 %v82, 1.442695
    %v85 = vpow.pop %v84
    %v86 = vmul.f32 %v83, 1.442695
    %v87 = vpow.pop %v86
    %v88 = vadd.f32 %v85, 1.0
    %v89 = vadd.f32 %v87, 1.0
    %v90 = vrcp.pop %v88
    %v91 = vmul.f32 1.0, %v90
    %v92 = vrcp.pop %v89
    %v93 = vmul.f32 1.0, %v92
    %v94 = vsel %vm78, 1, 0
    %v95 = vsel %vm79, 1, 0
    %vm96 = vcmp.eq.s32.totalorder %v94, 1
    %vm97 = vcmp.eq.s32.totalorder %v95, 1
    %v98 = vsel %vm96, %v91, 0.0
    %v99 = vsel %vm97, %v93, 0.0
    %v100 = vld [vmem:[#allocation8] sm:$0xff]
    %v101 = vld [vmem:[#allocation8 + $0x8] sm:$0xff]
    %vm102 = vcmp.gt.f32.partialorder %v100, 0.5
    %vm103 = vcmp.gt.f32.partialorder %v101, 0.5
    %vm104 = vmand %vm102, %vm96
    %vm105 = vmand %vm103, %vm97
    %v106 = vld [vmem:[#allocation2] sm:$0xff]
    %v107 = vld [vmem:[#allocation2 + $0x8] sm:$0xff]
    %v108 = vsel %vm104, %v98, 0.0
    %v109 = vsel %vm105, %v99, 0.0
    %v110 = vadd.f32 %v106, %v108
    %v111 = vadd.f32 %v107, %v109
    %112 = vst [vmem:[#allocation2] sm:$0xff] %v110
    %113 = vst [vmem:[#allocation2 + $0x8] sm:$0xff] %v111
    %v114 = vld [vmem:[#allocation3] sm:$0xff]
    %v115 = vld [vmem:[#allocation3 + $0x8] sm:$0xff]
    %v116 = vmul.f32 %v98, %v98
    %v117 = vmul.f32 %v99, %v99
    %v118 = vadd.f32 %v114, %v116
    %v119 = vadd.f32 %v115, %v117
    %120 = vst [vmem:[#allocation3] sm:$0xff] %v118
    %121 = vst [vmem:[#allocation3 + $0x8] sm:$0xff] %v119
    %v122 = vld [vmem:[#allocation4] sm:$0xff]
    %v123 = vld [vmem:[#allocation4 + $0x8] sm:$0xff]
    %v124 = vsel %vm104, 1.0, 0.0
    %v125 = vsel %vm105, 1.0, 0.0
    %v126 = vadd.f32 %v122, %v124
    %v127 = vadd.f32 %v123, %v125
    %128 = vst [vmem:[#allocation4] sm:$0xff] %v126
    %129 = vst [vmem:[#allocation4 + $0x8] sm:$0xff] %v127
    // Predicated region
    $region22: #{tpu_custom_call.1} parent=1 // pred_check
      %p130 = pneg %p60
    $region23: #{tpu_custom_call.1} parent=1 // pred_check_branch
      %132 = sbr.rel (%p130) target = $region25
    $region24: #{tpu_custom_call.1} parent=1 // pred_region
      %v133 = vld [vmem:[#allocation2] sm:$0xff]
      %v134 = vld [vmem:[#allocation2 + $0x8] sm:$0xff]
      %v135 = vadd.f32 %v133, %v134
      %136 = vst [vmem:[#allocation10] sm:$0xff] %v135
      %v137 = vld [vmem:[#allocation3] sm:$0xff]
      %v138 = vld [vmem:[#allocation3 + $0x8] sm:$0xff]
      %v139 = vadd.f32 %v137, %v138
      %s140 = scalar_lea.vmem [#allocation10], 8
      %141 = vst [vmem:[%s140] sm:$0xff] %v139
      %v142 = vld [vmem:[#allocation4] sm:$0xff]
      %v143 = vld [vmem:[#allocation4 + $0x8] sm:$0xff]
      %v144 = vadd.f32 %v142, %v143
      %s145 = scalar_lea.vmem [#allocation10], 16
      %146 = vst [vmem:[%s145] sm:$0xff] %v144
    $region25: #{tpu_custom_call.1} parent=1 // pred_fallthru
      _
    // Predicated region
    $region26: #{tpu_custom_call.1} parent=1 // pred_check
      _
    $region27: #{tpu_custom_call.1} parent=1 // pred_check_branch
      %148 = sbr.rel (0) target = $region29
    $region28: #{tpu_custom_call.1} parent=1 // pred_region
      %s150 = ssub.s32 384, 384
      %151 = vsyncadd [#allocation7], %s150
      %s152 = sshll.u32 [#allocation10], 4
      %s153 = int_to_ptr.vmem [resolvable:$true] %s152
      %158 = dma.vmem_to_hbm [thread:$0]  %s153, 384, %s2, [#allocation7], 128, 128, 8
    $region29: #{tpu_custom_call.1} parent=1 // pred_fallthru
      _
    // Predicated region
    $region30: #{tpu_custom_call.1} parent=1 // pred_check
      _
    $region31: #{tpu_custom_call.1} parent=1 // pred_check_branch
      %160 = sbr.rel (0) target = $region33
    $region32: #{tpu_custom_call.1} parent=1 // pred_region
      %161 = dma.done [#allocation7], 384
    $region33: #{tpu_custom_call.1} parent=1 // pred_fallthru
      _
    %162 = vsyncpa [#allocation6], 1
    %163 = vsyncpa [#allocation9], 1
    %164 = vsyncpa [#allocation7], 1

</llo_original>
